<compile_context>
chip_gen: v5e
topology: v5e:2x2
jax: 0.10.0
libtpu: 0.0.40
codegen_flags: <defaults>
</compile_context>

<pallas_src>
import math
from functools import partial

import jax
import jax.numpy as jnp
from jax.experimental import pallas as pl
from jax.experimental.pallas import tpu as pltpu


def _round_up(x, m):
    return ((x + m - 1) // m) * m


def _gelu_tanh(x):
    # GELU(approximate='tanh'), matching PyTorch exactly:
    # 0.5 * x * (1 + tanh(sqrt(2/pi) * (x + 0.044715 * x^3)))
    c = math.sqrt(2.0 / math.pi)
    return 0.5 * x * (1.0 + jnp.tanh(c * (x + 0.044715 * x * x * x)))


def mlp_kernel(x_ref, w1_ref, b1_ref, w2_ref, b2_ref, o_ref, acc_ref):
    # Grid: (i over row tiles, k over hidden tiles).  k is the reduction axis.
    # x_ref:  (tm, E)        w1_ref: (E, th)   b1_ref: (1, th)
    # w2_ref: (th, E)        b2_ref: (1, E)
    # o_ref:  (tm, E)        acc_ref: (tm, E) f32 scratch
    k = pl.program_id(1)

    @pl.when(k == 0)
    def _():
        # Fold the projection bias b2 into the accumulator init.
        acc_ref[...] = jnp.broadcast_to(
            b2_ref[...].astype(jnp.float32), acc_ref.shape)

    # fc: x @ w1[:, k-tile] + b1[k-tile]   (MXU, f32 accumulation)
    h = jnp.dot(x_ref[...], w1_ref[...], preferred_element_type=jnp.float32)
    h = h + b1_ref[...].astype(jnp.float32)

    # GELU(tanh) in f32 (VPU + EUP)
    g = _gelu_tanh(h)

    # proj partial: g @ w2[k-tile, :]   (MXU, f32 accumulation)
    acc_ref[...] += jnp.dot(g.astype(w2_ref.dtype), w2_ref[...],
                            preferred_element_type=jnp.float32)

    @pl.when(k == pl.num_programs(1) - 1)
    def _():
        o_ref[...] = acc_ref[...].astype(o_ref.dtype)


def mlp_forward(x, w1, b1, w2, b2, *, tm=256, th=512):
    """x: (B, T, E) -> (B, T, E).  Fused, H-tiled MLP via one Pallas kernel.

    Weights are stored transposed relative to torch.nn.Linear:
      w1: (E, H), b1: (1, H), w2: (H, E), b2: (1, E)  with H = 4E.
    """
    B, T, E = x.shape
    E_in, H = w1.shape
    assert E_in == E and w2.shape == (H, E)
    M = B * T
    x2d = x.reshape(M, E)

    # ---- row tile (second-to-last dim): multiple of 8 (16 for bf16 packing) ----
    row_align = 16 if x.dtype == jnp.bfloat16 else 8
    tm = min(tm, _round_up(M, row_align))
    tm = max(row_align, (tm // row_align) * row_align)
    Mp = _round_up(M, tm)
    if Mp != M:
        x2d = jnp.pad(x2d, ((0, Mp - M), (0, 0)))

    # ---- hidden tile (lane dim): multiple of 128 when possible ----
    if H >= 128:
        th = max(128, (min(th, H) // 128) * 128)
    else:
        th = H
    Hp = _round_up(H, th)
    if Hp != H:
        # Zero-padding H is exact: extra columns give GELU(0) = 0 and the
        # padded rows of w2 are zero, so they contribute nothing.
        w1 = jnp.pad(w1, ((0, 0), (0, Hp - H)))
        b1 = jnp.pad(b1, ((0, 0), (0, Hp - H)))
        w2 = jnp.pad(w2, ((0, Hp - H), (0, 0)))

    n_m = Mp // tm
    n_k = Hp // th

    itemsize = lambda a: jnp.dtype(a.dtype).itemsize
    cost = pl.CostEstimate(
        flops=2 * 2 * Mp * E * Hp,          # two matmuls
        transcendentals=Mp * Hp,            # one tanh per hidden element
        bytes_accessed=int(
            x2d.size * itemsize(x2d)
            + w1.size * itemsize(w1) + b1.size * itemsize(b1)
            + w2.size * itemsize(w2) + b2.size * itemsize(b2)
            + Mp * E * itemsize(x2d)),
    )

    out2d = pl.pallas_call(
        mlp_kernel,
        out_shape=jax.ShapeDtypeStruct((Mp, E), x.dtype),
        grid_spec=pltpu.PrefetchScalarGridSpec(
            num_scalar_prefetch=0,
            grid=(n_m, n_k),
            in_specs=[
                pl.BlockSpec((tm, E), lambda i, k: (i, 0)),   # x rows (resident over k)
                pl.BlockSpec((E, th), lambda i, k: (0, k)),   # w1 hidden tile
                pl.BlockSpec((1, th), lambda i, k: (0, k)),   # b1 hidden tile
                pl.BlockSpec((th, E), lambda i, k: (k, 0)),   # w2 hidden tile
                pl.BlockSpec((1, E), lambda i, k: (0, 0)),    # b2 (constant)
            ],
            out_specs=pl.BlockSpec((tm, E), lambda i, k: (i, 0)),
            scratch_shapes=[pltpu.VMEM((tm, E), jnp.float32)],
        ),
        compiler_params=pltpu.CompilerParams(
            dimension_semantics=("parallel", "arbitrary"),
            vmem_limit_bytes=48 * 1024 * 1024,
        ),
        cost_estimate=cost,
    )(x2d, w1, b1, w2, b2)

    return out2d[:M].reshape(B, T, E)


def init_params(key, embed, dtype=jnp.float32):
    """Deterministic init matching torch.nn.Linear shapes (weights transposed)."""
    hidden = 4 * embed
    k1, k2, k3, k4 = jax.random.split(key, 4)
    # torch.nn.Linear default init: U(-1/sqrt(fan_in), 1/sqrt(fan_in))
    bound1 = 1.0 / math.sqrt(embed)
    bound2 = 1.0 / math.sqrt(hidden)
    w1 = jax.random.uniform(k1, (embed, hidden), jnp.float32, -bound1, bound1)
    b1 = jax.random.uniform(k2, (1, hidden), jnp.float32, -bound1, bound1)
    w2 = jax.random.uniform(k3, (hidden, embed), jnp.float32, -bound2, bound2)
    b2 = jax.random.uniform(k4, (1, embed), jnp.float32, -bound2, bound2)
    return tuple(a.astype(dtype) for a in (w1, b1, w2, b2))


def _reference(x, w1, b1, w2, b2):
    # Plain-JAX reference in f32 (same math as the PyTorch module).
    B, T, E = x.shape
    x2 = x.reshape(-1, E).astype(jnp.float32)
    h = x2 @ w1.astype(jnp.float32) + b1.astype(jnp.float32)
    g = _gelu_tanh(h)
    y = g @ w2.astype(jnp.float32) + b2.astype(jnp.float32)
    return y.reshape(B, T, E)


if __name__ == "__main__":
    # Small config consistent with 预生转换器配置, 嵌长 scaled down to 32.
    B, T, E = 2, 8, 32           # batch=2, seq=8, embed=32 -> hidden 4E = 128
    key = jax.random.PRNGKey(0)
    kx, kp = jax.random.split(key)

    x = jax.random.normal(kx, (B, T, E), dtype=jnp.float32)
    w1, b1, w2, b2 = init_params(kp, E, dtype=jnp.float32)

    # --- f32 path: tight validation against the PyTorch-equivalent math ---
    out = jax.block_until_ready(mlp_forward(x, w1, b1, w2, b2))
    ref = _reference(x, w1, b1, w2, b2)
    assert jnp.allclose(out, ref, atol=1e-5, rtol=1e-5), "f32 mismatch"

    # --- bf16 fast path: native-dtype MXU operands, f32 accumulation ---
    xb = x.astype(jnp.bfloat16)
    w1b, b1b, w2b, b2b = (a.astype(jnp.bfloat16) for a in (w1, b1, w2, b2))
    out_bf16 = jax.block_until_ready(mlp_forward(xb, w1b, b1b, w2b, b2b))
    ref_bf16 = _reference(xb, w1b, b1b, w2b, b2b)
    assert jnp.allclose(out_bf16.astype(jnp.float32), ref_bf16,
                        atol=5e-2, rtol=5e-2), "bf16 mismatch"

    print("KERNEL_OK")
</pallas_src>

<mosaic_0001>
module attributes {stable_mosaic.version = 11 : i64} {
  func.func @mlp_kernel(%arg0: i32, %arg1: i32, %arg2: memref<16x32xf32, #tpu.memory_space<vmem>>, %arg3: memref<32x128xf32, #tpu.memory_space<vmem>>, %arg4: memref<1x128xf32, #tpu.memory_space<vmem>>, %arg5: memref<128x32xf32, #tpu.memory_space<vmem>>, %arg6: memref<1x32xf32, #tpu.memory_space<vmem>>, %arg7: memref<16x32xf32, #tpu.memory_space<vmem>>, %arg8: memref<16x32xf32, #tpu.memory_space<vmem>>) attributes {dimension_semantics = [#tpu.dimension_semantics<parallel>, #tpu.dimension_semantics<arbitrary>], iteration_bounds = array<i64: 1, 1>, scalar_prefetch = 0 : i64, scratch_operands = 1 : i64, tpu.core_type = #tpu.core_type<tc>, window_params = [{transform_indices = @transform_0, window_bounds = array<i64: 16, 32>}, {transform_indices = @transform_1, window_bounds = array<i64: 32, 128>}, {transform_indices = @transform_2, window_bounds = array<i64: 1, 128>}, {transform_indices = @transform_3, window_bounds = array<i64: 128, 32>}, {pipeline_mode = #tpu.pipeline_mode<synchronous>, transform_indices = @transform_4, window_bounds = array<i64: 1, 32>}, {transform_indices = @transform_5, window_bounds = array<i64: 16, 32>}]} {
    %c0_i32 = arith.constant 0 : i32
    %0 = arith.cmpi eq, %arg1, %c0_i32 : i32
    %1 = arith.extui %0 : i1 to i32
    %c0_i32_0 = arith.constant 0 : i32
    %2 = arith.cmpi ne, %1, %c0_i32_0 : i32
    scf.if %2 {
      %c0_19 = arith.constant 0 : index
      %c0_20 = arith.constant 0 : index
      %30 = vector.load %arg6[%c0_19, %c0_20] : memref<1x32xf32, #tpu.memory_space<vmem>>, vector<1x32xf32>
      %31 = vector.shape_cast %30 : vector<1x32xf32> to vector<1x32xf32>
      %32 = vector.broadcast %31 : vector<1x32xf32> to vector<16x32xf32>
      %c0_21 = arith.constant 0 : index
      %c0_22 = arith.constant 0 : index
      %33 = vector.load %arg8[%c0_21, %c0_22] : memref<16x32xf32, #tpu.memory_space<vmem>>, vector<16x32xf32>
      tpu.vector_store %arg8[%c0_21, %c0_22], %32 {strides = array<i32>} : memref<16x32xf32, #tpu.memory_space<vmem>>, vector<16x32xf32>,
    } else {
    }
    %c0 = arith.constant 0 : index
    %c0_1 = arith.constant 0 : index
    %3 = vector.load %arg2[%c0, %c0_1] : memref<16x32xf32, #tpu.memory_space<vmem>>, vector<16x32xf32>
    %c0_2 = arith.constant 0 : index
    %c0_3 = arith.constant 0 : index
    %4 = vector.load %arg3[%c0_2, %c0_3] : memref<32x128xf32, #tpu.memory_space<vmem>>, vector<32x128xf32>
    %cst = arith.constant dense<0.000000e+00> : vector<16x128xf32>
    %5 = tpu.matmul %3, %4, %cst {dimension_numbers = #tpu.dot_dimension_numbers<[1], [0], [0], [1], [0, 0, 1, 1], [], []>} : vector<16x32xf32>, vector<32x128xf32>, vector<16x128xf32> -> vector<16x128xf32>
    %c0_4 = arith.constant 0 : index
    %c0_5 = arith.constant 0 : index
    %6 = vector.load %arg4[%c0_4, %c0_5] : memref<1x128xf32, #tpu.memory_space<vmem>>, vector<1x128xf32>
    %7 = vector.broadcast %6 : vector<1x128xf32> to vector<16x128xf32>
    %8 = arith.addf %5, %7 : vector<16x128xf32>
    %cst_6 = arith.constant 5.000000e-01 : f32
    %9 = vector.broadcast %cst_6 : f32 to vector<16x128xf32>
    %10 = arith.mulf %9, %8 : vector<16x128xf32>
    %cst_7 = arith.constant 4.471500e-02 : f32
    %11 = vector.broadcast %cst_7 : f32 to vector<16x128xf32>
    %12 = arith.mulf %11, %8 : vector<16x128xf32>
    %13 = arith.mulf %12, %8 : vector<16x128xf32>
    %14 = arith.mulf %13, %8 : vector<16x128xf32>
    %15 = arith.addf %8, %14 : vector<16x128xf32>
    %cst_8 = arith.constant 0.797884583 : f32
    %16 = vector.broadcast %cst_8 : f32 to vector<16x128xf32>
    %17 = arith.mulf %16, %15 : vector<16x128xf32>
    %18 = math.tanh %17 : vector<16x128xf32>
    %cst_9 = arith.constant 1.000000e+00 : f32
    %19 = vector.broadcast %cst_9 : f32 to vector<16x128xf32>
    %20 = arith.addf %19, %18 : vector<16x128xf32>
    %21 = arith.mulf %10, %20 : vector<16x128xf32>
    %c0_10 = arith.constant 0 : index
    %c0_11 = arith.constant 0 : index
    %22 = vector.load %arg8[%c0_10, %c0_11] : memref<16x32xf32, #tpu.memory_space<vmem>>, vector<16x32xf32>
    %c0_12 = arith.constant 0 : index
    %c0_13 = arith.constant 0 : index
    %23 = vector.load %arg5[%c0_12, %c0_13] : memref<128x32xf32, #tpu.memory_space<vmem>>, vector<128x32xf32>
    %cst_14 = arith.constant dense<0.000000e+00> : vector<16x32xf32>
    %24 = tpu.matmul %21, %23, %cst_14 {dimension_numbers = #tpu.dot_dimension_numbers<[1], [0], [0], [1], [0, 0, 1, 1], [], []>} : vector<16x128xf32>, vector<128x32xf32>, vector<16x32xf32> -> vector<16x32xf32>
    %25 = arith.addf %22, %24 : vector<16x32xf32>
    %c0_15 = arith.constant 0 : index
    %c0_16 = arith.constant 0 : index
    %26 = vector.load %arg8[%c0_15, %c0_16] : memref<16x32xf32, #tpu.memory_space<vmem>>, vector<16x32xf32>
    tpu.vector_store %arg8[%c0_15, %c0_16], %25 {strides = array<i32>} : memref<16x32xf32, #tpu.memory_space<vmem>>, vector<16x32xf32>,
    %c0_i32_17 = arith.constant 0 : i32
    %27 = arith.cmpi eq, %arg1, %c0_i32_17 : i32
    %28 = arith.extui %27 : i1 to i32
    %c0_i32_18 = arith.constant 0 : i32
    %29 = arith.cmpi ne, %28, %c0_i32_18 : i32
    scf.if %29 {
      %c0_19 = arith.constant 0 : index
      %c0_20 = arith.constant 0 : index
      %30 = vector.load %arg8[%c0_19, %c0_20] : memref<16x32xf32, #tpu.memory_space<vmem>>, vector<16x32xf32>
      %c0_21 = arith.constant 0 : index
      %c0_22 = arith.constant 0 : index
      %31 = vector.load %arg7[%c0_21, %c0_22] : memref<16x32xf32, #tpu.memory_space<vmem>>, vector<16x32xf32>
      tpu.vector_store %arg7[%c0_21, %c0_22], %30 {strides = array<i32>} : memref<16x32xf32, #tpu.memory_space<vmem>>, vector<16x32xf32>,
    } else {
    }
    return
  }
  func.func @transform_0(%arg0: i32, %arg1: i32) -> (i32, i32) {
    %c0_i32 = arith.constant 0 : i32
    %c0_i32_0 = arith.constant 0 : i32
    return %arg0, %c0_i32 : i32, i32
  }
  func.func @transform_1(%arg0: i32, %arg1: i32) -> (i32, i32) {
    %c0_i32 = arith.constant 0 : i32
    %c0_i32_0 = arith.constant 0 : i32
    return %c0_i32, %arg1 : i32, i32
  }
  func.func @transform_2(%arg0: i32, %arg1: i32) -> (i32, i32) {
    %c0_i32 = arith.constant 0 : i32
    %c0_i32_0 = arith.constant 0 : i32
    return %c0_i32, %arg1 : i32, i32
  }
  func.func @transform_3(%arg0: i32, %arg1: i32) -> (i32, i32) {
    %c0_i32 = arith.constant 0 : i32
    %c0_i32_0 = arith.constant 0 : i32
    return %arg1, %c0_i32 : i32, i32
  }
  func.func @transform_4(%arg0: i32, %arg1: i32) -> (i32, i32) {
    %c0_i32 = arith.constant 0 : i32
    %c0_i32_0 = arith.constant 0 : i32
    %c0_i32_1 = arith.constant 0 : i32
    return %c0_i32, %c0_i32_0 : i32, i32
  }
  func.func @transform_5(%arg0: i32, %arg1: i32) -> (i32, i32) {
    %c0_i32 = arith.constant 0 : i32
    %c0_i32_0 = arith.constant 0 : i32
    return %arg0, %c0_i32 : i32, i32
  }
}

</mosaic_0001>

<llo_original>
// kernel: tpu_custom_call.1
$region0: #{tpu_custom_call.1}
  #allocation0 [shape = 'u32[]', space=smem, size = 0x4, offset = 0x4, fixed_abs, tag = 'smem constant byte address 0x4 - core index']
  #allocation1 [shape = 'u32[72,128]{1,0:T(1,128)}', space=vmem, size = 0x9000, scoped, tag = 'internal scratch']
  #allocation2 [shape = 'f32[16,32]{1,0:T(8,128)}', space=vmem, size = 0x2000, scoped, tag = 'scratch operand']
  %s0 = inlined_call_operand.vmem [shape: f32[16,32], index: 0, kind: input, shape index: {}]
  %s1 = inlined_call_operand.vmem [shape: f32[32,128], index: 1, kind: input, shape index: {}]
  %s2 = inlined_call_operand.vmem [shape: f32[1,128], index: 2, kind: input, shape index: {}]
  %s3 = inlined_call_operand.vmem [shape: f32[128,32], index: 3, kind: input, shape index: {}]
  %s4 = inlined_call_operand.vmem [shape: f32[1,32], index: 4, kind: input, shape index: {}]
  %s5 = inlined_call_operand.hbm [shape: f32[16,32], index: 5, kind: output, shape index: {}]
  %s6 = sld [smem:[#allocation0]]
  $region38: #{tpu_custom_call.1} parent=0
    _
  %s8 = ssub.s32 1, %s6
  %s9 = scalar_select 0, %s8, %s6
  $region1: #{tpu_custom_call.1} parent=0
    #allocation3 [shape = 'u8[8192]{0}', space=vmem, size = 0x2000, scoped, tag = 'output window, operand 0, single buffered']
    #allocation4 [shape = 's32[1]{0}', space=sflag, size = 0x4, scoped, tag = 'scoped memory for tpu_custom_call.1']
    %10 = vsyncpa [#allocation4], 0
    // Predicated region
    $region2: #{tpu_custom_call.1} parent=1 // pred_check
      _
    $region3: #{tpu_custom_call.1} parent=1 // pred_check_branch
      %12 = sbr.rel (0) target = $region5
    $region4: #{tpu_custom_call.1} parent=1 // pred_region
      _
    $region5: #{tpu_custom_call.1} parent=1 // pred_fallthru
      _
    // Predicated region
    $region6: #{tpu_custom_call.1} parent=1 // pred_check
      _
    $region7: #{tpu_custom_call.1} parent=1 // pred_check_branch
      %14 = sbr.rel (0) target = $region9
    $region8: #{tpu_custom_call.1} parent=1 // pred_region
      _
    $region9: #{tpu_custom_call.1} parent=1 // pred_fallthru
      _
    // Predicated region
    $region10: #{tpu_custom_call.1} parent=1 // pred_check
      _
    $region11: #{tpu_custom_call.1} parent=1 // pred_check_branch
      %16 = sbr.rel (0) target = $region13
    $region12: #{tpu_custom_call.1} parent=1 // pred_region
      _
    $region13: #{tpu_custom_call.1} parent=1 // pred_fallthru
      _
    // Predicated region
    $region14: #{tpu_custom_call.1} parent=1 // pred_check
      _
    $region15: #{tpu_custom_call.1} parent=1 // pred_check_branch
      %18 = sbr.rel (0) target = $region17
    $region16: #{tpu_custom_call.1} parent=1 // pred_region
      _
    $region17: #{tpu_custom_call.1} parent=1 // pred_fallthru
      _
    // Predicated region
    $region18: #{tpu_custom_call.1} parent=1 // pred_check
      _
    $region19: #{tpu_custom_call.1} parent=1 // pred_check_branch
      %20 = sbr.rel (0) target = $region21
    $region20: #{tpu_custom_call.1} parent=1 // pred_region
      _
    $region21: #{tpu_custom_call.1} parent=1 // pred_fallthru
      _
    %p21 = scmp.eq.s32.totalorder 0, 0
    // Predicated region
    $region22: #{tpu_custom_call.1} parent=1 // pred_check
      %p22 = pneg %p21
    $region23: #{tpu_custom_call.1} parent=1 // pred_check_branch
      %24 = sbr.rel (%p22) target = $region25
    $region24: #{tpu_custom_call.1} parent=1 // pred_region
      %v25 = vld [vmem:[%s4] sm:$0x1]
      %v27 = vperm.slane %v25, 0
      %vm29 = vcmask 261120
      %30 = vst.msk [vmem:[#allocation2] sm:$0xff] %vm29, %v27
      %31 = vst.msk [vmem:[#allocation2 + $0x8] sm:$0xff] %vm29, %v27
    $region25: #{tpu_custom_call.1} parent=1 // pred_fallthru
      _
    %v32 = vld [vmem:[%s0] sm:$0xff]
    %v33 = vld [vmem:[%s0 + $0x8] sm:$0xff]
    %v34 = vld [vmem:[%s1] sm:$0xff]
    %v35 = vld [vmem:[%s1 + $0x8] sm:$0xff]
    %v36 = vld [vmem:[%s1 + $0x10] sm:$0xff]
    %v37 = vld [vmem:[%s1 + $0x18] sm:$0xff]
    %v38 = vld [vmem:[%s2] sm:$0x1]
    %v40 = vperm.slane %v38, 0
    %vm42 = vcmask 261120
    %v44 = vsel %vm42, %v32, 0
    %v47 = vsel %vm42, %v33, 0
    %49 = vmatpush.msra.mxu0 0.0
    %50 = vmatpush.msra.mxu0 0.0
    %51 = vmatpush.msra.mxu0 0.0
    %52 = vmatpush.msra.mxu0 0.0
    %53 = vmatpush.msra.mxu0 0.0
    %54 = vmatpush.msra.mxu0 0.0
    %55 = vmatpush.msra.mxu0 0.0
    %56 = vmatpush.msra.mxu0 0.0
    %57 = vmatpush.msra.mxu0 0.0
    %58 = vmatpush.msra.mxu0 0.0
    %59 = vmatpush.msra.mxu0 0.0
    %60 = vmatpush.msra.mxu0 0.0
    %61 = vmatpush.msra.mxu0 %v37
    %62 = vmatpush.msra.mxu0 %v36
    %63 = vmatpush.msra.mxu0 %v35
    %64 = vmatpush.msra.mxu0 %v34
    %65 = vmatmul.f32.gmra.mxu0 %v44
    %v66 = vpop.f32.mrf.mxu0
    %v67 = vadd.f32 %v40, %v66
    %68 = vmatmul.f32.gmra.mxu0 %v47
    %v69 = vpop.f32.mrf.mxu0
    %v70 = vadd.f32 %v40, %v69
    %71 = vdwg.mxu0
    %v72 = vmul.f32 %v67, 0.5
    %v73 = vmul.f32 %v70, 0.5
    %v74 = vmul.f32 %v67, 0.044715
    %v75 = vmul.f32 %v70, 0.044715
    %v76 = vmul.f32 %v74, %v67
    %v77 = vmul.f32 %v75, %v70
    %v78 = vmul.f32 %v76, %v67
    %v79 = vmul.f32 %v77, %v70
    %v80 = vadd.f32 %v67, %v78
    %v81 = vadd.f32 %v70, %v79
    %v82 = vmul.f32 %v80, 0.7978846
    %v83 = vmul.f32 %v81, 0.7978846
    %v84 = vtanh.pop %v82
    %v85 = vtanh.pop %v83
    %v86 = vadd.f32 %v84, 1.0
    %v87 = vadd.f32 %v85, 1.0
    %v88 = vmul.f32 %v72, %v86
    %v89 = vmul.f32 %v73, %v87
    %v90 = vld [vmem:[#allocation2] sm:$0xff]
    %v91 = vld [vmem:[#allocation2 + $0x8] sm:$0xff]
    %v92 = vld [vmem:[%s3] sm:$0xff]
    %v93 = vld [vmem:[%s3 + $0x8] sm:$0xff]
    %v94 = vld [vmem:[%s3 + $0x10] sm:$0xff]
    %v95 = vld [vmem:[%s3 + $0x18] sm:$0xff]
    %v96 = vld [vmem:[%s3 + $0x20] sm:$0xff]
    %v97 = vld [vmem:[%s3 + $0x28] sm:$0xff]
    %v98 = vld [vmem:[%s3 + $0x30] sm:$0xff]
    %v99 = vld [vmem:[%s3 + $0x38] sm:$0xff]
    %v100 = vld [vmem:[%s3 + $0x40] sm:$0xff]
    %v101 = vld [vmem:[%s3 + $0x48] sm:$0xff]
    %v102 = vld [vmem:[%s3 + $0x50] sm:$0xff]
    %v103 = vld [vmem:[%s3 + $0x58] sm:$0xff]
    %v104 = vld [vmem:[%s3 + $0x60] sm:$0xff]
    %v105 = vld [vmem:[%s3 + $0x68] sm:$0xff]
    %v106 = vld [vmem:[%s3 + $0x70] sm:$0xff]
    %v107 = vld [vmem:[%s3 + $0x78] sm:$0xff]
    %108 = vmatpush.msra.mxu0 %v107
    %109 = vmatpush.msra.mxu0 %v106
    %110 = vmatpush.msra.mxu0 %v105
    %111 = vmatpush.msra.mxu0 %v104
    %112 = vmatpush.msra.mxu0 %v103
    %113 = vmatpush.msra.mxu0 %v102
    %114 = vmatpush.msra.mxu0 %v101
    %115 = vmatpush.msra.mxu0 %v100
    %116 = vmatpush.msra.mxu0 %v99
    %117 = vmatpush.msra.mxu0 %v98
    %118 = vmatpush.msra.mxu0 %v97
    %119 = vmatpush.msra.mxu0 %v96
    %120 = vmatpush.msra.mxu0 %v95
    %121 = vmatpush.msra.mxu0 %v94
    %122 = vmatpush.msra.mxu0 %v93
    %123 = vmatpush.msra.mxu0 %v92
    %124 = vmatmul.f32.gmra.mxu0 %v88
    %v125 = vpop.f32.mrf.mxu0
    %v126 = vadd.f32 0.0, %v125
    %127 = vmatmul.f32.gmra.mxu0 %v89
    %v128 = vpop.f32.mrf.mxu0
    %v129 = vadd.f32 0.0, %v128
    %130 = vdwg.mxu0
    %v131 = vadd.f32 %v90, %v126
    %v132 = vadd.f32 %v91, %v129
    %133 = vst.msk [vmem:[#allocation2] sm:$0xff] %vm42, %v131
    %134 = vst.msk [vmem:[#allocation2 + $0x8] sm:$0xff] %vm42, %v132
    // Predicated region
    $region26: #{tpu_custom_call.1} parent=1 // pred_check
      %p135 = pneg %p21
    $region27: #{tpu_custom_call.1} parent=1 // pred_check_branch
      %137 = sbr.rel (%p135) target = $region29
    $region28: #{tpu_custom_call.1} parent=1 // pred_region
      %v138 = vld [vmem:[#allocation2] sm:$0xff]
      %v139 = vld [vmem:[#allocation2 + $0x8] sm:$0xff]
      %140 = vst.msk [vmem:[#allocation3] sm:$0xff] %vm42, %v138
      %141 = vst.msk [vmem:[#allocation3 + $0x8] sm:$0xff] %vm42, %v139
    $region29: #{tpu_custom_call.1} parent=1 // pred_fallthru
      _
    // Predicated region
    $region30: #{tpu_custom_call.1} parent=1 // pred_check
      _
    $region31: #{tpu_custom_call.1} parent=1 // pred_check_branch
      %143 = sbr.rel (0) target = $region33
    $region32: #{tpu_custom_call.1} parent=1 // pred_region
      %145 = vsyncadd [#allocation4], 0
      %s146 = sshll.u32 [#allocation3], 4
      %s147 = int_to_ptr.vmem [resolvable:$true] %s146
      %s148 = sshll.u32 %s5, 4
      %s149 = int_to_ptr.hbm [resolvable:$true] %s148
      %154 = dma.vmem_to_hbm [thread:$0]  %s147, 256, %s149, [#allocation4], 128, 128, 8
    $region33: #{tpu_custom_call.1} parent=1 // pred_fallthru
      _
    // Predicated region
    $region34: #{tpu_custom_call.1} parent=1 // pred_check
      _
    $region35: #{tpu_custom_call.1} parent=1 // pred_check_branch
      %156 = sbr.rel (0) target = $region37
    $region36: #{tpu_custom_call.1} parent=1 // pred_region
      %158 = dma.done [#allocation4], 256
    $region37: #{tpu_custom_call.1} parent=1 // pred_fallthru
      _
    %159 = vsyncpa [#allocation4], 1

</llo_original>
